<compile_context>
chip_gen: v6e
topology: v6e:2x2x1
jax: 0.10.0
libtpu: 0.0.40
codegen_flags: <defaults>
</compile_context>

<pallas_src>
import functools

import jax
import jax.numpy as jnp
from jax import lax
from jax.experimental import pallas as pl
from jax.experimental.pallas import tpu as pltpu

_MIB = 1024 * 1024


def _ca_kernel(x_ref, w1_ref, mb_ref, w2_ref, o_ref, acc_ref, *,
               low_dim, hw_total, hw_tile, mask_hw):
    # x_ref : (Bt, C, HW_T)   w1_ref: (C_low, C)   mb_ref: (C_low, M)
    # w2_ref: (C, C_low)      o_ref : (Bt, C)      acc_ref: (Bt, C) f32 scratch
    hw_i = pl.program_id(1)

    @pl.when(hw_i == 0)
    def _init():
        acc_ref[...] = jnp.zeros_like(acc_ref)

    # ---- spatial partial sum (f32 accumulation, no full-tile upcast) ----
    x = x_ref[...]
    if mask_hw:
        # Final spatial tile may run past H*W (cdiv grid); OOB lanes hold
        # unspecified data, so mask them out.  Cheap VPU work, hidden under DMA.
        lane = lax.broadcasted_iota(jnp.int32, x.shape, x.ndim - 1)
        valid = (hw_i * hw_tile + lane) < hw_total
        x = jnp.where(valid, x, 0)
    acc_ref[...] += jnp.sum(x, axis=-1, dtype=jnp.float32)

    # ---- epilogue: tiny attention chain, once per output block ----
    @pl.when(hw_i == pl.num_programs(1) - 1)
    def _epilogue():
        pooled = acc_ref[...] * (1.0 / float(hw_total))                 # (Bt, C)

        # subnet: 1x1 conv (no bias) == pooled @ W1^T  (MXU in weight dtype)
        w1 = w1_ref[...]                                                # (C_low, C)
        low = lax.dot_general(pooled.astype(w1.dtype), w1,
                              (((1,), (1,)), ((), ())),
                              preferred_element_type=jnp.float32)       # (Bt, C_low)

        # attention over memory blocks
        mb = mb_ref[...]                                                # (C_low, M)
        f1 = jnp.dot(low.astype(mb.dtype), mb,
                     preferred_element_type=jnp.float32)                # (Bt, M)
        f1 = f1 * (float(low_dim) ** -0.5)
        m = jnp.max(f1, axis=-1, keepdims=True)
        e = jnp.exp(f1 - m)
        attn = e / jnp.sum(e, axis=-1, keepdims=True)                   # exact softmax

        # reconstruct in low-rank space: attn @ mb^T
        y1 = lax.dot_general(attn.astype(mb.dtype), mb,
                             (((1,), (1,)), ((), ())),
                             preferred_element_type=jnp.float32)        # (Bt, C_low)

        # upnet: 1x1 conv (no bias) + sigmoid
        w2 = w2_ref[...]                                                # (C, C_low)
        y2 = lax.dot_general(y1.astype(w2.dtype), w2,
                             (((1,), (1,)), ((), ())),
                             preferred_element_type=jnp.float32)        # (Bt, C)
        o_ref[...] = jax.nn.sigmoid(y2).astype(o_ref.dtype)


def _vmem_capacity_bytes(default=64 * _MIB):
    """Generation-aware VMEM size; conservative (v7x-like) if query fails."""
    try:
        cap = getattr(pltpu.get_tpu_info(), "vmem_capacity_bytes", None)
        if cap:
            return int(cap)
    except Exception:
        pass
    return default


def _choose_bt(B):
    """Largest divisor of B that is <= 8 (sublane-dense batch groups), while
    keeping >= 2 batch groups when B > 1 so both v7x TensorCores get work."""
    if B <= 1:
        return 1
    cap = 8 if B > 8 else max(1, B // 2)
    for bt in range(min(cap, B), 0, -1):
        if B % bt == 0:
            return bt
    return 1


def _choose_hw_tile(hw, bt, c, itemsize, budget_bytes):
    """Returns (hw_tile, n_hw, mask_needed).

    Largest multiple-of-128 tile whose double-buffered x block
    (2 * bt * c * tile * itemsize) fits `budget_bytes`.  Prefers an exact
    divisor of hw (no masked tail) when it is not tiny; otherwise uses the
    budget-sized tile with a cdiv grid and an in-kernel mask on the last tile.
    """
    bytes_per_lane = 2 * bt * c * itemsize
    max_lanes = max(128, (budget_bytes // bytes_per_lane) // 128 * 128)
    if hw <= max_lanes:
        return hw, 1, False                      # single full-extent tile
    best_div = None
    t = 128
    while t <= max_lanes:
        if hw % t == 0:
            best_div = t
        t += 128
    min_tile = min(512, max_lanes)               # avoid sub-KiB DMA segments
    if best_div is not None and best_div >= min_tile:
        return best_div, hw // best_div, False
    return max_lanes, pl.cdiv(hw, max_lanes), True


def ca_layer(x, w1, mb, w2, *, hw_tile=None):
    """x: (B, C, H, W).  Returns (B, C, 1, 1) attention weights (sigmoid)."""
    B, C, H, W = x.shape
    C_low, M = mb.shape
    assert w1.shape == (C_low, C) and w2.shape == (C, C_low)
    HW = H * W

    # Batch grouping without padding: Bt divides B, grouped via a free reshape.
    Bt = _choose_bt(B)
    n_groups = B // Bt
    x_g = x.reshape(n_groups, Bt, C, HW)

    itemsize = jnp.dtype(x.dtype).itemsize

    # Generation-aware VMEM budgets.
    vmem_cap = _vmem_capacity_bytes()
    if vmem_cap >= 96 * _MIB:            # v5e / v6e: 128 MiB physical VMEM
        vmem_limit = 64 * _MIB
        x_budget = 40 * _MIB
    else:                                # v7x: 64 MiB per TensorCore
        vmem_limit = 48 * _MIB
        x_budget = 28 * _MIB
    # Leave room for the 2-deep weight buffers + accumulator scratch.
    w_itemsize = jnp.dtype(w1.dtype).itemsize
    weight_bytes = (w1.size + mb.size + w2.size) * w_itemsize
    x_budget = max(x_budget - 2 * weight_bytes, 4 * _MIB)

    if hw_tile is not None:
        if hw_tile >= HW:
            HW_T, n_hw, mask_hw = HW, 1, False
        else:
            assert hw_tile % 128 == 0, "hw_tile must be a multiple of 128"
            HW_T = hw_tile
            n_hw = pl.cdiv(HW, HW_T)
            mask_hw = (HW % HW_T) != 0
    else:
        HW_T, n_hw, mask_hw = _choose_hw_tile(HW, Bt, C, itemsize, x_budget)

    kernel = functools.partial(_ca_kernel, low_dim=C_low, hw_total=HW,
                               hw_tile=HW_T, mask_hw=mask_hw)

    flops = B * C * HW + 2 * B * (C * C_low + 2 * C_low * M + C_low * C)
    bytes_accessed = (x.size + w1.size + mb.size + w2.size + B * C) * itemsize
    cost = pl.CostEstimate(flops=flops,
                           transcendentals=B * (M + C),
                           bytes_accessed=bytes_accessed)

    out = pl.pallas_call(
        kernel,
        out_shape=jax.ShapeDtypeStruct((n_groups, Bt, C), x.dtype),
        grid_spec=pltpu.PrefetchScalarGridSpec(
            num_scalar_prefetch=0,
            grid=(n_groups, n_hw),
            in_specs=[
                pl.BlockSpec((None, Bt, C, HW_T), lambda g, s: (g, 0, 0, s)),
                pl.BlockSpec((C_low, C), lambda g, s: (0, 0)),
                pl.BlockSpec((C_low, M), lambda g, s: (0, 0)),
                pl.BlockSpec((C, C_low), lambda g, s: (0, 0)),
            ],
            out_specs=pl.BlockSpec((None, Bt, C), lambda g, s: (g, 0, 0)),
            scratch_shapes=[pltpu.VMEM((Bt, C), jnp.float32)],
        ),
        compiler_params=pltpu.CompilerParams(
            dimension_semantics=("parallel", "arbitrary"),
            vmem_limit_bytes=vmem_limit,
        ),
        cost_estimate=cost,
    )(x_g, w1, mb, w2)

    return out.reshape(B, C, 1, 1)


def ca_layer_ref(x, w1, mb, w2):
    """Pure-JAX reference of the PyTorch forward."""
    B, C, H, W = x.shape
    C_low = mb.shape[0]
    pooled = jnp.mean(x, axis=(2, 3))                       # (B, C)
    low = pooled @ w1.T                                     # (B, C_low)
    f1 = low @ mb                                           # (B, M)
    attn = jax.nn.softmax(f1 * (float(C_low) ** -0.5), axis=-1)
    y1 = attn @ mb.T                                        # (B, C_low)
    y2 = jax.nn.sigmoid(y1 @ w2.T)                          # (B, C)
    return y2.reshape(B, C, 1, 1)


if __name__ == "__main__":
    def run_case(B, C, H, W, reduction, memory_blocks, hw_tile=None):
        C_low = C // reduction
        key = jax.random.PRNGKey(0)
        kx, k1, kmb, k2 = jax.random.split(key, 4)
        x = jax.random.normal(kx, (B, C, H, W), dtype=jnp.float32)
        # Conv2d(C, C_low, 1, bias=False) weight -> (C_low, C)
        w1 = jax.random.normal(k1, (C_low, C), dtype=jnp.float32) * 0.1
        # memory bank (C_low, memory_blocks)
        mbp = jax.random.normal(kmb, (C_low, memory_blocks), dtype=jnp.float32)
        # Conv2d(C_low, C, 1, bias=False) weight -> (C, C_low)
        w2 = jax.random.normal(k2, (C, C_low), dtype=jnp.float32) * 0.1

        out = jax.block_until_ready(ca_layer(x, w1, mbp, w2, hw_tile=hw_tile))
        ref = ca_layer_ref(x, w1, mbp, w2)
        assert out.shape == (B, C, 1, 1)
        assert jnp.allclose(out, ref, atol=5e-4, rtol=5e-4), "mismatch vs reference"

    # case 1: tiny shapes, single spatial tile, 2 batch groups of 1
    run_case(2, 16, 16, 16, 4, 128)
    # case 2: non-8-divisible batch (Bt=3, 3 groups, no padding) + multi-step
    #         divisible H*W tiling (384 / 128 = 3 steps)
    run_case(9, 32, 16, 24, 4, 128, hw_tile=128)
    # case 3: H*W=324 not a multiple of 128 -> cdiv grid + masked final tile
    run_case(4, 16, 18, 18, 4, 64, hw_tile=128)
    print("KERNEL_OK")
</pallas_src>

<mosaic_0001>
module attributes {stable_mosaic.version = 11 : i64} {
  func.func @_ca_kernel(%arg0: i32, %arg1: i32, %arg2: memref<1x1x16x256xf32, #tpu.memory_space<vmem>>, %arg3: memref<4x16xf32, #tpu.memory_space<vmem>>, %arg4: memref<4x128xf32, #tpu.memory_space<vmem>>, %arg5: memref<16x4xf32, #tpu.memory_space<vmem>>, %arg6: memref<1x1x16xf32, #tpu.memory_space<vmem>>, %arg7: memref<1x16xf32, #tpu.memory_space<vmem>>) attributes {dimension_semantics = [#tpu.dimension_semantics<parallel>, #tpu.dimension_semantics<arbitrary>], iteration_bounds = array<i64: 2, 1>, scalar_prefetch = 0 : i64, scratch_operands = 1 : i64, tpu.core_type = #tpu.core_type<tc>, window_params = [{transform_indices = @transform_0, window_bounds = array<i64: 1, 1, 16, 256>}, {pipeline_mode = #tpu.pipeline_mode<synchronous>, transform_indices = @transform_1, window_bounds = array<i64: 4, 16>}, {pipeline_mode = #tpu.pipeline_mode<synchronous>, transform_indices = @transform_2, window_bounds = array<i64: 4, 128>}, {pipeline_mode = #tpu.pipeline_mode<synchronous>, transform_indices = @transform_3, window_bounds = array<i64: 16, 4>}, {transform_indices = @transform_4, window_bounds = array<i64: 1, 1, 16>}]} {
    %c0_i32 = arith.constant 0 : i32
    %0 = arith.cmpi eq, %arg1, %c0_i32 : i32
    %1 = arith.extui %0 : i1 to i32
    %c0_i32_0 = arith.constant 0 : i32
    %2 = arith.cmpi ne, %1, %c0_i32_0 : i32
    scf.if %2 {
      %cst_10 = arith.constant 0.000000e+00 : f32
      %12 = vector.broadcast %cst_10 : f32 to vector<1x16xf32>
      %c0_11 = arith.constant 0 : index
      %c0_12 = arith.constant 0 : index
      %13 = vector.load %arg7[%c0_11, %c0_12] : memref<1x16xf32, #tpu.memory_space<vmem>>, vector<1x16xf32>
      tpu.vector_store %arg7[%c0_11, %c0_12], %12 {strides = array<i32>} : memref<1x16xf32, #tpu.memory_space<vmem>>, vector<1x16xf32>,
    } else {
    }
    %c0 = arith.constant 0 : index
    %c0_1 = arith.constant 0 : index
    %c0_2 = arith.constant 0 : index
    %c0_3 = arith.constant 0 : index
    %3 = vector.load %arg2[%c0, %c0_1, %c0_2, %c0_3] : memref<1x1x16x256xf32, #tpu.memory_space<vmem>>, vector<1x1x16x256xf32>
    %4 = vector.shape_cast %3 : vector<1x1x16x256xf32> to vector<1x16x256xf32>
    %c0_4 = arith.constant 0 : index
    %c0_5 = arith.constant 0 : index
    %5 = vector.load %arg7[%c0_4, %c0_5] : memref<1x16xf32, #tpu.memory_space<vmem>>, vector<1x16xf32>
    %cst = arith.constant dense<0.000000e+00> : vector<1x16xf32>
    %6 = vector.multi_reduction <add>, %4, %cst [2] : vector<1x16x256xf32> to vector<1x16xf32>
    %7 = arith.addf %5, %6 : vector<1x16xf32>
    %c0_6 = arith.constant 0 : index
    %c0_7 = arith.constant 0 : index
    %8 = vector.load %arg7[%c0_6, %c0_7] : memref<1x16xf32, #tpu.memory_space<vmem>>, vector<1x16xf32>
    tpu.vector_store %arg7[%c0_6, %c0_7], %7 {strides = array<i32>} : memref<1x16xf32, #tpu.memory_space<vmem>>, vector<1x16xf32>,
    %c0_i32_8 = arith.constant 0 : i32
    %9 = arith.cmpi eq, %arg1, %c0_i32_8 : i32
    %10 = arith.extui %9 : i1 to i32
    %c0_i32_9 = arith.constant 0 : i32
    %11 = arith.cmpi ne, %10, %c0_i32_9 : i32
    scf.if %11 {
      %c0_10 = arith.constant 0 : index
      %c0_11 = arith.constant 0 : index
      %12 = vector.load %arg7[%c0_10, %c0_11] : memref<1x16xf32, #tpu.memory_space<vmem>>, vector<1x16xf32>
      %cst_12 = arith.constant 3.906250e-03 : f32
      %13 = vector.broadcast %cst_12 : f32 to vector<1x16xf32>
      %14 = arith.mulf %12, %13 : vector<1x16xf32>
      %c0_13 = arith.constant 0 : index
      %c0_14 = arith.constant 0 : index
      %15 = vector.load %arg3[%c0_13, %c0_14] : memref<4x16xf32, #tpu.memory_space<vmem>>, vector<4x16xf32>
      %cst_15 = arith.constant dense<0.000000e+00> : vector<1x4xf32>
      %16 = tpu.matmul %14, %15, %cst_15 {dimension_numbers = #tpu.dot_dimension_numbers<[1], [1], [0], [0], [0, 0, 1, 0], [], []>} : vector<1x16xf32>, vector<4x16xf32>, vector<1x4xf32> -> vector<1x4xf32>
      %c0_16 = arith.constant 0 : index
      %c0_17 = arith.constant 0 : index
      %17 = vector.load %arg4[%c0_16, %c0_17] : memref<4x128xf32, #tpu.memory_space<vmem>>, vector<4x128xf32>
      %cst_18 = arith.constant dense<0.000000e+00> : vector<1x128xf32>
      %18 = tpu.matmul %16, %17, %cst_18 {dimension_numbers = #tpu.dot_dimension_numbers<[1], [0], [0], [1], [0, 0, 1, 1], [], []>} : vector<1x4xf32>, vector<4x128xf32>, vector<1x128xf32> -> vector<1x128xf32>
      %cst_19 = arith.constant 5.000000e-01 : f32
      %19 = vector.broadcast %cst_19 : f32 to vector<1x128xf32>
      %20 = arith.mulf %18, %19 : vector<1x128xf32>
      %cst_20 = arith.constant dense<0xFF800000> : vector<1xf32>
      %21 = vector.multi_reduction <maximumf>, %20, %cst_20 [1] : vector<1x128xf32> to vector<1xf32>
      %22 = vector.shape_cast %21 : vector<1xf32> to vector<1x1xf32>
      %23 = vector.broadcast %22 : vector<1x1xf32> to vector<1x128xf32>
      %24 = arith.subf %20, %23 : vector<1x128xf32>
      %25 = math.exp %24 : vector<1x128xf32>
      %cst_21 = arith.constant dense<0.000000e+00> : vector<1xf32>
      %26 = vector.multi_reduction <add>, %25, %cst_21 [1] : vector<1x128xf32> to vector<1xf32>
      %27 = vector.shape_cast %26 : vector<1xf32> to vector<1x1xf32>
      %28 = vector.broadcast %27 : vector<1x1xf32> to vector<1x128xf32>
      %29 = arith.divf %25, %28 : vector<1x128xf32>
      %cst_22 = arith.constant dense<0.000000e+00> : vector<1x4xf32>
      %30 = tpu.matmul %29, %17, %cst_22 {dimension_numbers = #tpu.dot_dimension_numbers<[1], [1], [0], [0], [0, 0, 1, 0], [], []>} : vector<1x128xf32>, vector<4x128xf32>, vector<1x4xf32> -> vector<1x4xf32>
      %c0_23 = arith.constant 0 : index
      %c0_24 = arith.constant 0 : index
      %31 = vector.load %arg5[%c0_23, %c0_24] : memref<16x4xf32, #tpu.memory_space<vmem>>, vector<16x4xf32>
      %cst_25 = arith.constant dense<0.000000e+00> : vector<1x16xf32>
      %32 = tpu.matmul %30, %31, %cst_25 {dimension_numbers = #tpu.dot_dimension_numbers<[1], [1], [0], [0], [0, 0, 1, 0], [], []>} : vector<1x4xf32>, vector<16x4xf32>, vector<1x16xf32> -> vector<1x16xf32>
      %33 = arith.negf %32 : vector<1x16xf32>
      %34 = math.exp %33 : vector<1x16xf32>
      %cst_26 = arith.constant 1.000000e+00 : f32
      %35 = vector.broadcast %cst_26 : f32 to vector<1x16xf32>
      %36 = arith.addf %35, %34 : vector<1x16xf32>
      %37 = arith.divf %35, %36 : vector<1x16xf32>
      %c0_27 = arith.constant 0 : index
      %c0_28 = arith.constant 0 : index
      %c0_29 = arith.constant 0 : index
      %38 = vector.load %arg6[%c0_27, %c0_28, %c0_29] : memref<1x1x16xf32, #tpu.memory_space<vmem>>, vector<1x1x16xf32>
      %39 = vector.shape_cast %38 : vector<1x1x16xf32> to vector<1x16xf32>
      %40 = vector.shape_cast %37 : vector<1x16xf32> to vector<1x1x16xf32>
      tpu.vector_store %arg6[%c0_27, %c0_28, %c0_29], %40 {strides = array<i32>} : memref<1x1x16xf32, #tpu.memory_space<vmem>>, vector<1x1x16xf32>,
    } else {
    }
    return
  }
  func.func @transform_0(%arg0: i32, %arg1: i32) -> (i32, i32, i32, i32) {
    %c0_i32 = arith.constant 0 : i32
    %c0_i32_0 = arith.constant 0 : i32
    %c0_i32_1 = arith.constant 0 : i32
    return %arg0, %c0_i32, %c0_i32_0, %arg1 : i32, i32, i32, i32
  }
  func.func @transform_1(%arg0: i32, %arg1: i32) -> (i32, i32) {
    %c0_i32 = arith.constant 0 : i32
    %c0_i32_0 = arith.constant 0 : i32
    %c0_i32_1 = arith.constant 0 : i32
    return %c0_i32, %c0_i32_0 : i32, i32
  }
  func.func @transform_2(%arg0: i32, %arg1: i32) -> (i32, i32) {
    %c0_i32 = arith.constant 0 : i32
    %c0_i32_0 = arith.constant 0 : i32
    %c0_i32_1 = arith.constant 0 : i32
    return %c0_i32, %c0_i32_0 : i32, i32
  }
  func.func @transform_3(%arg0: i32, %arg1: i32) -> (i32, i32) {
    %c0_i32 = arith.constant 0 : i32
    %c0_i32_0 = arith.constant 0 : i32
    %c0_i32_1 = arith.constant 0 : i32
    return %c0_i32, %c0_i32_0 : i32, i32
  }
  func.func @transform_4(%arg0: i32, %arg1: i32) -> (i32, i32, i32) {
    %c0_i32 = arith.constant 0 : i32
    %c0_i32_0 = arith.constant 0 : i32
    %c0_i32_1 = arith.constant 0 : i32
    return %arg0, %c0_i32, %c0_i32_0 : i32, i32, i32
  }
}

</mosaic_0001>

<llo_original>
// kernel: tpu_custom_call.1
$region0: #{tpu_custom_call.1}
  #allocation0 [shape = 'u32[]', space=smem, size = 0x4, offset = 0x4, fixed_abs, tag = 'smem constant byte address 0x4 - core index']
  #allocation1 [shape = 'u32[144,128]{1,0:T(1,128)}', space=vmem, size = 0x12000, scoped, tag = 'internal scratch']
  #allocation2 [shape = 'f32[1,16]{1,0:T(1,128)}', space=vmem, size = 0x200, scoped, tag = 'scratch operand']
  %s0 = inlined_call_operand.hbm [shape: f32[2,1,16,256], index: 0, kind: input, shape index: {}]
  %s1 = inlined_call_operand.vmem [shape: f32[4,16], index: 1, kind: input, shape index: {}]
  %s2 = inlined_call_operand.vmem [shape: f32[4,128], index: 2, kind: input, shape index: {}]
  %s3 = inlined_call_operand.vmem [shape: f32[16,4], index: 3, kind: input, shape index: {}]
  %s4 = inlined_call_operand.hbm [shape: f32[2,1,16], index: 4, kind: output, shape index: {}]
  %s5 = sld [smem:[#allocation0]]
  $region61: #{tpu_custom_call.1} parent=0
    _
  %s7 = ssub.s32 1, %s5
  %s8 = scalar_select 0, %s7, %s5
  $region1: #{tpu_custom_call.1} parent=0
    #allocation3 [shape = 'u8[32768]{0}', space=vmem, size = 0x8000, scoped, tag = 'input window, operand 0']
    #allocation4 [shape = 's32[2]{0}', space=sflag, size = 0x8, scoped, tag = 'scoped memory for tpu_custom_call.1']
    #allocation5 [shape = 's32[2]{0}', space=sflag, size = 0x8, scoped, tag = 'scoped memory for tpu_custom_call.1']
    #allocation6 [shape = 'u8[1024]{0}', space=vmem, size = 0x400, scoped, tag = 'output window, operand 0']
    %9 = vsyncpa [#allocation4], 0
    %s10 = scalar_lea.sflag [#allocation4], 1
    %11 = vsyncpa %s10, 0
    %12 = vsyncpa [#allocation5], 0
    %s13 = scalar_lea.sflag [#allocation5], 1
    %14 = vsyncpa %s13, 0
    loop: start=0, step=1, limit=4
    $region2: #{tpu_custom_call.1} parent=1 // loop_pre_header
      _
    $region3: #{tpu_custom_call.1} parent=1 // loop_header
      %s16 = sphi 0, %s20
      %p17 = scmp.ge.s32.totalorder %s16, 4
      %s23 = sphi 0, %s35
      %s24 = sphi 0, %s31
      %s25 = sphi 0, %s23
      %s26 = sphi 0, %s24
      %s27 = sphi 0, %s25
      %s28 = sphi 0, %s26
      %s40 = sphi 0, %s42
      %s43 = sphi 0, %s40
      %s44 = sphi 0, %s43
      %s60 = sphi 0, %s44
      %s64 = sphi 0, %s64
      %s66 = sphi 0, %s64
      %s67 = sphi 0, %s66
      %s81 = sphi 0, %s67
      %s85 = sphi 0, %s85
      %s87 = sphi 0, %s85
      %s88 = sphi 0, %s87
      %s102 = sphi 0, %s88
      %s106 = sphi 0, %s106
      %s108 = sphi 0, %s106
      %s109 = sphi 0, %s108
      %s123 = sphi 0, %s109
      %s129 = sphi 0, %s131
      %s132 = sphi 0, %s129
      %s133 = sphi 0, %s132
      %s149 = sphi 0, %s133
    $region4: #{tpu_custom_call.1} parent=1 // loop_header_branch
      %19 = sbr.rel (%p17) target = $region8
    $region5: #{tpu_custom_call.1} parent=1 // loop_body
      %s21 = ssub.s32 %s16, 1
      %s22 = ssub.s32 %s16, 2
      %s29 = sadd.s32 1, %s24
      %p30 = scmp.ge.s32.totalorder %s29, 1
      %s31 = scalar_select %p30, 0, %s29
      %s32 = sadd.s32 1, %s23
      %s33 = scalar_select %p30, %s32, %s23
      %p34 = scmp.ge.s32.totalorder %s33, 2
      %s35 = scalar_select %p34, 0, %s33
      %s36 = ssub.s32 %s23, %s35
      %s37 = ssub.s32 %s24, %s31
      %s38 = sor.u32 %s36, %s37
      %p39 = scmp.eq.s32.totalorder %s38, 0
      %s41 = sadd.s32 %s40, 1
      %s42 = scalar_select %p39, %s40, %s41
      %p45 = pneg %p39
      %p46 = scmp.eq.s32.totalorder %s16, 1
      %p47 = por %p45, %p46
      %p48 = scmp.ne.s32.totalorder %s40, %s43
      %p49 = scmp.eq.s32.totalorder %s16, 0
      %p50 = por %p48, %p49
      %p51 = scmp.ne.s32.totalorder %s40, %s43
      %p52 = scmp.eq.s32.totalorder %s21, 1
      %p53 = por %p51, %p52
      %p54 = scmp.ne.s32.totalorder %s43, %s44
      %p55 = scmp.eq.s32.totalorder %s21, 0
      %p56 = por %p54, %p55
      %p57 = scmp.ne.s32.totalorder %s43, %s44
      %p58 = scmp.eq.s32.totalorder %s22, 1
      %p59 = por %p57, %p58
      %p61 = scmp.ne.s32.totalorder %s44, %s60
      %p62 = scmp.eq.s32.totalorder %s22, 0
      %p63 = por %p61, %p62
      %s65 = sadd.s32 %s64, 1
      %p68 = scmp.eq.s32.totalorder %s16, 1
      %p69 = scmp.ne.s32.totalorder %s64, %s66
      %p70 = scmp.eq.s32.totalorder %s16, 0
      %p71 = por %p69, %p70
      %p72 = scmp.ne.s32.totalorder %s64, %s66
      %p73 = scmp.eq.s32.totalorder %s21, 1
      %p74 = por %p72, %p73
      %p75 = scmp.ne.s32.totalorder %s66, %s67
      %p76 = scmp.eq.s32.totalorder %s21, 0
      %p77 = por %p75, %p76
      %p78 = scmp.ne.s32.totalorder %s66, %s67
      %p79 = scmp.eq.s32.totalorder %s22, 1
      %p80 = por %p78, %p79
      %p82 = scmp.ne.s32.totalorder %s67, %s81
      %p83 = scmp.eq.s32.totalorder %s22, 0
      %p84 = por %p82, %p83
      %s86 = sadd.s32 %s85, 1
      %p89 = scmp.eq.s32.totalorder %s16, 1
      %p90 = scmp.ne.s32.totalorder %s85, %s87
      %p91 = scmp.eq.s32.totalorder %s16, 0
      %p92 = por %p90, %p91
      %p93 = scmp.ne.s32.totalorder %s85, %s87
      %p94 = scmp.eq.s32.totalorder %s21, 1
      %p95 = por %p93, %p94
      %p96 = scmp.ne.s32.totalorder %s87, %s88
      %p97 = scmp.eq.s32.totalorder %s21, 0
      %p98 = por %p96, %p97
      %p99 = scmp.ne.s32.totalorder %s87, %s88
      %p100 = scmp.eq.s32.totalorder %s22, 1
      %p101 = por %p99, %p100
      %p103 = scmp.ne.s32.totalorder %s88, %s102
      %p104 = scmp.eq.s32.totalorder %s22, 0
      %p105 = por %p103, %p104
      %s107 = sadd.s32 %s106, 1
      %p110 = scmp.eq.s32.totalorder %s16, 1
      %p111 = scmp.ne.s32.totalorder %s106, %s108
      %p112 = scmp.eq.s32.totalorder %s16, 0
      %p113 = por %p111, %p112
      %p114 = scmp.ne.s32.totalorder %s106, %s108
      %p115 = scmp.eq.s32.totalorder %s21, 1
      %p116 = por %p114, %p115
      %p117 = scmp.ne.s32.totalorder %s108, %s109
      %p118 = scmp.eq.s32.totalorder %s21, 0
      %p119 = por %p117, %p118
      %p120 = scmp.ne.s32.totalorder %s108, %s109
      %p121 = scmp.eq.s32.totalorder %s22, 1
      %p122 = por %p120, %p121
      %p124 = scmp.ne.s32.totalorder %s109, %s123
      %p125 = scmp.eq.s32.totalorder %s22, 0
      %p126 = por %p124, %p125
      %s127 = ssub.s32 %s23, %s35
      %p128 = scmp.eq.s32.totalorder %s127, 0
      %s130 = sadd.s32 %s129, 1
      %s131 = scalar_select %p128, %s129, %s130
      %p134 = pneg %p128
      %p135 = scmp.eq.s32.totalorder %s16, 1
      %p136 = por %p134, %p135
      %p137 = scmp.ne.s32.totalorder %s129, %s132
      %p138 = scmp.eq.s32.totalorder %s16, 0
      %p139 = por %p137, %p138
      %p140 = scmp.ne.s32.totalorder %s129, %s132
      %p141 = scmp.eq.s32.totalorder %s21, 1
      %p142 = por %p140, %p141
      %p143 = scmp.ne.s32.totalorder %s132, %s133
      %p144 = scmp.eq.s32.totalorder %s21, 0
      %p145 = por %p143, %p144
      %p146 = scmp.ne.s32.totalorder %s132, %s133
      %p147 = scmp.eq.s32.totalorder %s22, 1
      %p148 = por %p146, %p147
      %p150 = scmp.ne.s32.totalorder %s133, %s149
      %p151 = scmp.eq.s32.totalorder %s22, 0
      %p152 = por %p150, %p151
      %p153 = scmp.le.s32.totalorder 1, %s16
      %p154 = scmp.lt.s32.totalorder %s16, 3
      %p155 = pnand %p153, %p154
      %p156 = pneg %p155
      // Predicated region
      $region9: #{tpu_custom_call.1} parent=5 // pred_check
        _
      $region10: #{tpu_custom_call.1} parent=5 // pred_check_branch
        %158 = sbr.rel (%p155) target = $region12
      $region11: #{tpu_custom_call.1} parent=5 // pred_region
        %s159 = ssub.s32 %s16, 1
        // Predicated region
        $region13: #{tpu_custom_call.1} parent=11 // pred_check
          %p160 = pneg %p77
        $region14: #{tpu_custom_call.1} parent=11 // pred_check_branch
          %162 = sbr.rel (%p160) target = $region16
        $region15: #{tpu_custom_call.1} parent=11 // pred_region
          _
        $region16: #{tpu_custom_call.1} parent=11 // pred_fallthru
          _
        // Predicated region
        $region17: #{tpu_custom_call.1} parent=11 // pred_check
          %p163 = pneg %p98
        $region18: #{tpu_custom_call.1} parent=11 // pred_check_branch
          %165 = sbr.rel (%p163) target = $region20
        $region19: #{tpu_custom_call.1} parent=11 // pred_region
          _
        $region20: #{tpu_custom_call.1} parent=11 // pred_fallthru
          _
        // Predicated region
        $region21: #{tpu_custom_call.1} parent=11 // pred_check
          %p166 = pneg %p119
        $region22: #{tpu_custom_call.1} parent=11 // pred_check_branch
          %168 = sbr.rel (%p166) target = $region24
        $region23: #{tpu_custom_call.1} parent=11 // pred_region
          _
        $region24: #{tpu_custom_call.1} parent=11 // pred_fallthru
          _
      $region12: #{tpu_custom_call.1} parent=5 // pred_fallthru
        _
      %p169 = scmp.lt.s32.totalorder %s16, 2
      // Predicated region
      $region25: #{tpu_custom_call.1} parent=5 // pred_check
        %p170 = pneg %p169
      $region26: #{tpu_custom_call.1} parent=5 // pred_check_branch
        %172 = sbr.rel (%p170) target = $region28
      $region27: #{tpu_custom_call.1} parent=5 // pred_region
        // Predicated region
        $region29: #{tpu_custom_call.1} parent=27 // pred_check
          %p173 = pneg %p50
        $region30: #{tpu_custom_call.1} parent=27 // pred_check_branch
          %175 = sbr.rel (%p173) target = $region32
        $region31: #{tpu_custom_call.1} parent=27 // pred_region
          %s176 = sand.u32 %s40, 1
          %s177 = scalar_lea.sflag [#allocation4], %s176
          %s178 = sand.u32 %s40, 1
          %s179 = smul.addr %s178, 32
          %s180 = scalar_lea.vmem [#allocation3], %s179
          %s181 = smul.u32 2, %s24
          %s183 = ssub.s32 512, 512
          %184 = vsyncadd %s177, %s183
          %s185 = smul.addr %s23, 4
          %s186 = sadd.s32 %s181, %s185
          %s187 = smul.addr %s186, 128
          %s188 = scalar_lea.hbm %s0, %s187
          %s189 = sshll.u32 %s180, 4
          %s190 = int_to_ptr.vmem [resolvable:$true] %s189
          %195 = dma.hbm_to_vmem [thread:$0]  %s188, 512, %s190, %s177, 256, 256, 16
        $region32: #{tpu_custom_call.1} parent=27 // pred_fallthru
          _
      $region28: #{tpu_custom_call.1} parent=5 // pred_fallthru
        _
      %p196 = scmp.le.s32.totalorder 1, %s16
      %p197 = scmp.lt.s32.totalorder %s16, 3
      %p198 = pnand %p196, %p197
      %p199 = pneg %p198
      // Predicated region
      $region33: #{tpu_custom_call.1} parent=5 // pred_check
        _
      $region34: #{tpu_custom_call.1} parent=5 // pred_check_branch
        %201 = sbr.rel (%p198) target = $region36
      $region35: #{tpu_custom_call.1} parent=5 // pred_region
        %s202 = ssub.s32 %s16, 1
        %s203 = sand.u32 %s43, 1
        %s204 = scalar_lea.sflag [#allocation4], %s203
        %s205 = sand.u32 %s43, 1
        %s206 = smul.addr %s205, 32
        %s207 = scalar_lea.vmem [#allocation3], %s206
        // Predicated region
        $region37: #{tpu_custom_call.1} parent=35 // pred_check
          %p208 = pneg %p56
        $region38: #{tpu_custom_call.1} parent=35 // pred_check_branch
          %210 = sbr.rel (%p208) target = $region40
        $region39: #{tpu_custom_call.1} parent=35 // pred_region
          %211 = dma.done %s204, 512
        $region40: #{tpu_custom_call.1} parent=35 // pred_fallthru
          _
        %s212 = sand.u32 %s43, 1
        %s213 = scalar_lea.sflag [#allocation4], %s212
        %s214 = sand.u32 %s43, 1
        %s215 = smul.addr %s214, 32
        %s216 = scalar_lea.vmem [#allocation3], %s215
        %p217 = pneg %p56
        %p218 = pneg %p53
        %p219 = pneg %p77
        %p220 = pneg %p74
        %p221 = pneg %p98
        %p222 = pneg %p95
        %p223 = pneg %p119
        %p224 = pneg %p116
        %p225 = pneg %p145
        %p226 = pneg %p142
        %s227 = sand.u32 %s132, 1
        %s228 = scalar_lea.sflag [#allocation5], %s227
        %s229 = sand.u32 %s132, 1
        %s230 = scalar_lea.vmem [#allocation6], %s229
        %s231 = smul.u32 2, %s26
        %p232 = scmp.eq.s32.totalorder %s26, 0
        // Predicated region
        $region41: #{tpu_custom_call.1} parent=35 // pred_check
          %p233 = pneg %p232
        $region42: #{tpu_custom_call.1} parent=35 // pred_check_branch
          %235 = sbr.rel (%p233) target = $region44
        $region43: #{tpu_custom_call.1} parent=35 // pred_region
          %vm236 = vcmask 122880
          %237 = vst.msk [vmem:[#allocation2] sm:$0x1] %vm236, 0.0
        $region44: #{tpu_custom_call.1} parent=35 // pred_fallthru
          _
        %v238 = vld [vmem:[%s207] sm:$0xff]
        %v239 = vld [vmem:[%s207 + $0x8] sm:$0xff]
        %v240 = vld [vmem:[%s207 + $0x10] sm:$0xff]
        %v241 = vld [vmem:[%s207 + $0x18] sm:$0xff]
        %v242 = vld [vmem:[#allocation2] sm:$0x1]
        %v243 = vadd.f32 %v238, %v239
        %244 = vadd.xlane.f32.xlu0 %v243
        %v245 = vpop.xlane.xlu0 %244
        %v246 = vadd.f32 %v240, %v241
        %247 = vadd.xlane.f32.xlu0 %v246
        %v248 = vpop.xlane.xlu0 %247
        %v251 = vlaneseq
        %v252 = vshrl.u32 %v251, 7
        %v253 = vsub.s32 0, %v252
        %v254 = vrot.slane %v245, %v253
        %v255 = vlaneseq
        %v256 = vshrl.u32 %v255, 7
        %v257 = vsub.s32 1, %v256
        %v258 = vrot.slane %v245, %v257
        %v259 = vlaneseq
        %v260 = vshrl.u32 %v259, 7
        %v261 = vsub.s32 2, %v260
        %v262 = vrot.slane %v245, %v261
        %v263 = vlaneseq
        %v264 = vshrl.u32 %v263, 7
        %v265 = vsub.s32 3, %v264
        %v266 = vrot.slane %v245, %v265
        %v267 = vlaneseq
        %v268 = vshrl.u32 %v267, 7
        %v269 = vsub.s32 4, %v268
        %v270 = vrot.slane %v245, %v269
        %v271 = vlaneseq
        %v272 = vshrl.u32 %v271, 7
        %v273 = vsub.s32 5, %v272
        %v274 = vrot.slane %v245, %v273
        %v275 = vlaneseq
        %v276 = vshrl.u32 %v275, 7
        %v277 = vsub.s32 6, %v276
        %v278 = vrot.slane %v245, %v277
        %v279 = vlaneseq
        %v280 = vshrl.u32 %v279, 7
        %v281 = vsub.s32 7, %v280
        %v282 = vrot.slane %v245, %v281
        %v283 = vlaneseq
        %v284 = vshrl.u32 %v283, 7
        %v285 = vsub.s32 0, %v284
        %v286 = vrot.slane %v248, %v285
        %v287 = vlaneseq
        %v288 = vshrl.u32 %v287, 7
        %v289 = vsub.s32 1, %v288
        %v290 = vrot.slane %v248, %v289
        %v291 = vlaneseq
        %v292 = vshrl.u32 %v291, 7
        %v293 = vsub.s32 2, %v292
        %v294 = vrot.slane %v248, %v293
        %v295 = vlaneseq
        %v296 = vshrl.u32 %v295, 7
        %v297 = vsub.s32 3, %v296
        %v298 = vrot.slane %v248, %v297
        %v299 = vlaneseq
        %v300 = vshrl.u32 %v299, 7
        %v301 = vsub.s32 4, %v300
        %v302 = vrot.slane %v248, %v301
        %v303 = vlaneseq
        %v304 = vshrl.u32 %v303, 7
        %v305 = vsub.s32 5, %v304
        %v306 = vrot.slane %v248, %v305
        %v307 = vlaneseq
        %v308 = vshrl.u32 %v307, 7
        %v309 = vsub.s32 6, %v308
        %v310 = vrot.slane %v248, %v309
        %v311 = vlaneseq
        %v312 = vshrl.u32 %v311, 7
        %v313 = vsub.s32 7, %v312
        %v314 = vrot.slane %v248, %v313
        %v315 = vcombine.low %v254, %v258
        %v316 = vcombine.low %v262, %v266
        %v317 = vcombine.low %v270, %v274
        %v318 = vcombine.low %v278, %v282
        %v320 = vunpack.c.l.s4 1966171168
        %v321 = vunpack.c.0.s8 %v320
        %v322 = vlaneseq
        %v323 = vshrl.u32 %v322, 7
        %v324 = vsub.s32 %v321, %v323
        %v325 = vrot.slane %v315, %v324
        %v327 = vunpack.c.l.s4 1966171168
        %v328 = vunpack.c.0.s8 %v327
        %v329 = vlaneseq
        %v330 = vshrl.u32 %v329, 7
        %v331 = vsub.s32 %v328, %v330
        %v332 = vrot.slane %v316, %v331
        %v334 = vunpack.c.l.s4 1966171168
        %v335 = vunpack.c.0.s8 %v334
        %v336 = vlaneseq
        %v337 = vshrl.u32 %v336, 7
        %v338 = vsub.s32 %v335, %v337
        %v339 = vrot.slane %v317, %v338
        %v341 = vunpack.c.l.s4 1966171168
        %v342 = vunpack.c.0.s8 %v341
        %v343 = vlaneseq
        %v344 = vshrl.u32 %v343, 7
        %v345 = vsub.s32 %v342, %v344
        %v346 = vrot.slane %v318, %v345
        %v347 = vcombine.low %v325, %v332
        %v348 = vcombine.low %v339, %v346
        %v350 = vunpack.c.l.s4 1966171168
        %v351 = vunpack.c.0.s8 %v350
        %v352 = vlaneseq
        %v353 = vshrl.u32 %v352, 7
        %v354 = vsub.s32 %v351, %v353
        %v355 = vrot.slane %v347, %v354
        %v357 = vunpack.c.l.s4 1966171168
        %v358 = vunpack.c.0.s8 %v357
        %v359 = vlaneseq
        %v360 = vshrl.u32 %v359, 7
        %v361 = vsub.s32 %v358, %v360
        %v362 = vrot.slane %v348, %v361
        %v363 = vcombine.low %v355, %v362
        %v364 = vcombine.low %v286, %v290
        %v365 = vcombine.low %v294, %v298
        %v366 = vcombine.low %v302, %v306
        %v367 = vcombine.low %v310, %v314
        %v369 = vunpack.c.l.s4 1966171168
        %v370 = vunpack.c.0.s8 %v369
        %v371 = vlaneseq
        %v372 = vshrl.u32 %v371, 7
        %v373 = vsub.s32 %v370, %v372
        %v374 = vrot.slane %v364, %v373
        %v376 = vunpack.c.l.s4 1966171168
        %v377 = vunpack.c.0.s8 %v376
        %v378 = vlaneseq
        %v379 = vshrl.u32 %v378, 7
        %v380 = vsub.s32 %v377, %v379
        %v381 = vrot.slane %v365, %v380
        %v383 = vunpack.c.l.s4 1966171168
        %v384 = vunpack.c.0.s8 %v383
        %v385 = vlaneseq
        %v386 = vshrl.u32 %v385, 7
        %v387 = vsub.s32 %v384, %v386
        %v388 = vrot.slane %v366, %v387
        %v390 = vunpack.c.l.s4 1966171168
        %v391 = vunpack.c.0.s8 %v390
        %v392 = vlaneseq
        %v393 = vshrl.u32 %v392, 7
        %v394 = vsub.s32 %v391, %v393
        %v395 = vrot.slane %v367, %v394
        %v396 = vcombine.low %v374, %v381
        %v397 = vcombine.low %v388, %v395
        %v399 = vunpack.c.l.s4 1966171168
        %v400 = vunpack.c.0.s8 %v399
        %v401 = vlaneseq
        %v402 = vshrl.u32 %v401, 7
        %v403 = vsub.s32 %v400, %v402
        %v404 = vrot.slane %v396, %v403
        %v406 = vunpack.c.l.s4 1966171168
        %v407 = vunpack.c.0.s8 %v406
        %v408 = vlaneseq
        %v409 = vshrl.u32 %v408, 7
        %v410 = vsub.s32 %v407, %v409
        %v411 = vrot.slane %v397, %v410
        %v412 = vcombine.low %v404, %v411
        %413 = vset.pattern.permute.xlu0 0
        %414 = vperm.xlu0 %413, %v363
        %v415 = vpop.permute.xlu0 %414
        %416 = vset.pattern.permute.xlu0 0
        %417 = vperm.xlu0 %416, %v412
        %v418 = vpop.permute.xlu0 %417
        %v419 = vlaneseq
        %v420 = vand.u32 %v419, 127
        %v421 = vlaneseq
        %v422 = vshrl.u32 %v421, 7
        %v423 = vsub.s32 %v420, %v422
        %v424 = vrot.slane %v415, %v423
        %v425 = vadd.s32 %v420, 4294967288
        %v426 = vlaneseq
        %v427 = vshrl.u32 %v426, 7
        %v428 = vsub.s32 %v425, %v427
        %v429 = vrot.slane %v418, %v428
        %vm430 = vcmask 130112
        %v431 = vsel %vm430, %v429, %v424
        %v433 = vunpack.c.l.s4 1966171168
        %v434 = vunpack.c.0.s8 %v433
        %v435 = vlaneseq
        %v436 = vshrl.u32 %v435, 7
        %v437 = vsub.s32 %v434, %v436
        %v438 = vrot.slane %v431, %v437
        %v440 = vunpack.c.l.s4 1966171168
        %v441 = vunpack.c.0.s8 %v440
        %v442 = vlaneseq
        %v443 = vshrl.u32 %v442, 7
        %v444 = vsub.s32 %v441, %v443
        %v445 = vrot.slane %v438, %v444
        %v447 = vadd.f32 %v242, %v445
        %vm448 = vcmask 122880
        %449 = vst.msk [vmem:[#allocation2] sm:$0x1] %vm448, %v447
        // Predicated region
        $region45: #{tpu_custom_call.1} parent=35 // pred_check
          %p450 = pneg %p232
        $region46: #{tpu_custom_call.1} parent=35 // pred_check_branch
          %452 = sbr.rel (%p450) target = $region48
        $region47: #{tpu_custom_call.1} parent=35 // pred_region
          %v453 = vld [vmem:[#allocation2] sm:$0x1]
          %v454 = vmul.f32 %v453, 0.00390625
          %v455 = vld [vmem:[%s1] sm:$0xf]
          %vm456 = vcmask 130048
          %v458 = vsel %vm456, %v454, 0
          %v461 = vsel %vm456, %v455, 0
          %463 = vmatprep.subr.mxu0 0.0
          %464 = vmatpush1.xpose.msra.mxu0 0.0
          %465 = vmatprep.subr.mxu0 0.0
          %466 = vmatpush1.xpose.msra.mxu0 0.0
          %467 = vmatprep.subr.mxu0 0.0
          %468 = vmatpush1.xpose.msra.mxu0 0.0
          %469 = vmatprep.subr.mxu0 0.0
          %470 = vmatpush1.xpose.msra.mxu0 0.0
          %471 = vmatprep.subr.mxu0 0.0
          %472 = vmatpush1.xpose.msra.mxu0 0.0
          %473 = vmatprep.subr.mxu0 0.0
          %474 = vmatpush1.xpose.msra.mxu0 0.0
          %475 = vmatprep.subr.mxu0 0.0
          %476 = vmatpush1.xpose.msra.mxu0 0.0
          %477 = vmatprep.subr.mxu0 0.0
          %478 = vmatpush1.xpose.msra.mxu0 0.0
          %479 = vmatprep.subr.mxu0 0.0
          %480 = vmatpush1.xpose.msra.mxu0 0.0
          %481 = vmatprep.subr.mxu0 0.0
          %482 = vmatpush1.xpose.msra.mxu0 0.0
          %483 = vmatprep.subr.mxu0 0.0
          %484 = vmatpush1.xpose.msra.mxu0 0.0
          %485 = vmatprep.subr.mxu0 0.0
          %486 = vmatpush1.xpose.msra.mxu0 0.0
          %487 = vmatprep.subr.mxu0 0.0
          %488 = vmatpush1.xpose.msra.mxu0 0.0
          %489 = vmatprep.subr.mxu0 0.0
          %490 = vmatpush1.xpose.msra.mxu0 0.0
          %491 = vmatprep.subr.mxu0 0.0
          %492 = vmatpush1.xpose.msra.mxu0 0.0
          %493 = vmatprep.subr.mxu0 0.0
          %494 = vmatpush1.xpose.msra.mxu0 %v461
          %495 = vmatprep.subr.mxu0 0.0
          %496 = vmatpush2.xpose.msra.mxu0 0.0
          %497 = vmatprep.subr.mxu0 0.0
          %498 = vmatpush2.xpose.msra.mxu0 0.0
          %499 = vmatprep.subr.mxu0 0.0
          %500 = vmatpush2.xpose.msra.mxu0 0.0
          %501 = vmatprep.subr.mxu0 0.0
          %502 = vmatpush2.xpose.msra.mxu0 0.0
          %503 = vmatprep.subr.mxu0 0.0
          %504 = vmatpush2.xpose.msra.mxu0 0.0
          %505 = vmatprep.subr.mxu0 0.0
          %506 = vmatpush2.xpose.msra.mxu0 0.0
          %507 = vmatprep.subr.mxu0 0.0
          %508 = vmatpush2.xpose.msra.mxu0 0.0
          %509 = vmatprep.subr.mxu0 0.0
          %510 = vmatpush2.xpose.msra.mxu0 0.0
          %511 = vmatprep.subr.mxu0 0.0
          %512 = vmatpush2.xpose.msra.mxu0 0.0
          %513 = vmatprep.subr.mxu0 0.0
          %514 = vmatpush2.xpose.msra.mxu0 0.0
          %515 = vmatprep.subr.mxu0 0.0
          %516 = vmatpush2.xpose.msra.mxu0 0.0
          %517 = vmatprep.subr.mxu0 0.0
          %518 = vmatpush2.xpose.msra.mxu0 0.0
          %519 = vmatprep.subr.mxu0 0.0
          %520 = vmatpush2.xpose.msra.mxu0 0.0
          %521 = vmatprep.subr.mxu0 0.0
          %522 = vmatpush2.xpose.msra.mxu0 0.0
          %523 = vmatprep.subr.mxu0 0.0
          %524 = vmatpush2.xpose.msra.mxu0 0.0
          %525 = vmatprep.subr.mxu0 0.0
          %526 = vmatpush2.xpose.msra.mxu0 0.0
          %527 = vmatprep.mubr.f32.mxu0 0.0
          %528 = vmatmul.mubr.f32.gmra.mxu0 %v458
          %v529 = vpop.f32.mrf.mxu0
          %v530 = vadd.f32 0.0, %v529
          %v531 = vpop.f32.mrf.mxu0
          %532 = vdwg.mxu0
          %v533 = vld [vmem:[%s2] sm:$0xf]
          %vm534 = vcmask 31744
          %v536 = vsel %vm534, %v530, 0
          %vm538 = vcmask 1043456
          %v540 = vsel %vm538, %v533, 0
          %542 = vmatprep.subr.mxu0 0.0
          %543 = vmatpush1.msra.mxu0 0.0
          %544 = vmatprep.subr.mxu0 0.0
          %545 = vmatpush1.msra.mxu0 0.0
          %546 = vmatprep.subr.mxu0 0.0
          %547 = vmatpush1.msra.mxu0 0.0
          %548 = vmatprep.subr.mxu0 0.0
          %549 = vmatpush1.msra.mxu0 0.0
          %550 = vmatprep.subr.mxu0 0.0
          %551 = vmatpush1.msra.mxu0 0.0
          %552 = vmatprep.subr.mxu0 0.0
          %553 = vmatpush1.msra.mxu0 0.0
          %554 = vmatprep.subr.mxu0 0.0
          %555 = vmatpush1.msra.mxu0 0.0
          %556 = vmatprep.subr.mxu0 0.0
          %557 = vmatpush1.msra.mxu0 0.0
          %558 = vmatprep.subr.mxu0 0.0
          %559 = vmatpush1.msra.mxu0 0.0
          %560 = vmatprep.subr.mxu0 0.0
          %561 = vmatpush1.msra.mxu0 0.0
          %562 = vmatprep.subr.mxu0 0.0
          %563 = vmatpush1.msra.mxu0 0.0
          %564 = vmatprep.subr.mxu0 0.0
          %565 = vmatpush1.msra.mxu0 0.0
          %566 = vmatprep.subr.mxu0 0.0
          %567 = vmatpush1.msra.mxu0 0.0
          %568 = vmatprep.subr.mxu0 0.0
          %569 = vmatpush1.msra.mxu0 0.0
          %570 = vmatprep.subr.mxu0 0.0
          %571 = vmatpush1.msra.mxu0 0.0
          %572 = vmatprep.subr.mxu0 0.0
          %573 = vmatpush1.msra.mxu0 %v540
          %574 = vmatprep.subr.mxu0 0.0
          %575 = vmatpush2.msra.mxu0 0.0
          %576 = vmatprep.subr.mxu0 0.0
          %577 = vmatpush2.msra.mxu0 0.0
          %578 = vmatprep.subr.mxu0 0.0
          %579 = vmatpush2.msra.mxu0 0.0
          %580 = vmatprep.subr.mxu0 0.0
          %581 = vmatpush2.msra.mxu0 0.0
          %582 = vmatprep.subr.mxu0 0.0
          %583 = vmatpush2.msra.mxu0 0.0
          %584 = vmatprep.subr.mxu0 0.0
          %585 = vmatpush2.msra.mxu0 0.0
          %586 = vmatprep.subr.mxu0 0.0
          %587 = vmatpush2.msra.mxu0 0.0
          %588 = vmatprep.subr.mxu0 0.0
          %589 = vmatpush2.msra.mxu0 0.0
          %590 = vmatprep.subr.mxu0 0.0
          %591 = vmatpush2.msra.mxu0 0.0
          %592 = vmatprep.subr.mxu0 0.0
          %593 = vmatpush2.msra.mxu0 0.0
          %594 = vmatprep.subr.mxu0 0.0
          %595 = vmatpush2.msra.mxu0 0.0
          %596 = vmatprep.subr.mxu0 0.0
          %597 = vmatpush2.msra.mxu0 0.0
          %598 = vmatprep.subr.mxu0 0.0
          %599 = vmatpush2.msra.mxu0 0.0
          %600 = vmatprep.subr.mxu0 0.0
          %601 = vmatpush2.msra.mxu0 0.0
          %602 = vmatprep.subr.mxu0 0.0
          %603 = vmatpush2.msra.mxu0 0.0
          %604 = vmatprep.subr.mxu0 0.0
          %605 = vmatpush2.msra.mxu0 0.0
          %606 = vmatprep.mubr.f32.mxu0 0.0
          %607 = vmatmul.mubr.f32.gmra.mxu0 %v536
          %v608 = vpop.f32.mrf.mxu0
          %v609 = vadd.f32 0.0, %v608
          %v610 = vpop.f32.mrf.mxu0
          %611 = vdwg.mxu0
          %v612 = vmul.f32 %v609, 0.5
          %vm613 = vcmask 1040384
          %v614 = vsel %vm613, %v612, -inf
          %615 = vmax.xlane.f32.xlu0 %v614
          %v616 = vpop.xlane.xlu0 %615
          %v617 = vsub.f32 %v612, %v616
          %v618 = vmul.f32 %v617, 1.442695
          %v619 = vpow.pop %v618
          %v620 = vsel %vm613, %v619, 0.0
          %621 = vadd.xlane.f32.xlu0 %v620
          %v622 = vpop.xlane.xlu0 %621
          %v623 = vrcp.pop %v622
          %v624 = vmul.f32 %v619, %v623
          %625 = vmatprep.subr.mxu0 0.0
          %626 = vmatpush1.xpose.msra.mxu0 0.0
          %627 = vmatprep.subr.mxu0 0.0
          %628 = vmatpush1.xpose.msra.mxu0 0.0
          %629 = vmatprep.subr.mxu0 0.0
          %630 = vmatpush1.xpose.msra.mxu0 0.0
          %631 = vmatprep.subr.mxu0 0.0
          %632 = vmatpush1.xpose.msra.mxu0 0.0
          %633 = vmatprep.subr.mxu0 0.0
          %634 = vmatpush1.xpose.msra.mxu0 0.0
          %635 = vmatprep.subr.mxu0 0.0
          %636 = vmatpush1.xpose.msra.mxu0 0.0
          %637 = vmatprep.subr.mxu0 0.0
          %638 = vmatpush1.xpose.msra.mxu0 0.0
          %639 = vmatprep.subr.mxu0 0.0
          %640 = vmatpush1.xpose.msra.mxu0 0.0
          %641 = vmatprep.subr.mxu0 0.0
          %642 = vmatpush1.xpose.msra.mxu0 0.0
          %643 = vmatprep.subr.mxu0 0.0
          %644 = vmatpush1.xpose.msra.mxu0 0.0
          %645 = vmatprep.subr.mxu0 0.0
          %646 = vmatpush1.xpose.msra.mxu0 0.0
          %647 = vmatprep.subr.mxu0 0.0
          %648 = vmatpush1.xpose.msra.mxu0 0.0
          %649 = vmatprep.subr.mxu0 0.0
          %650 = vmatpush1.xpose.msra.mxu0 0.0
          %651 = vmatprep.subr.mxu0 0.0
          %652 = vmatpush1.xpose.msra.mxu0 0.0
          %653 = vmatprep.subr.mxu0 0.0
          %654 = vmatpush1.xpose.msra.mxu0 0.0
          %655 = vmatprep.subr.mxu0 0.0
          %656 = vmatpush1.xpose.msra.mxu0 %v533
          %657 = vmatprep.subr.mxu0 0.0
          %658 = vmatpush2.xpose.msra.mxu0 0.0
          %659 = vmatprep.subr.mxu0 0.0
          %660 = vmatpush2.xpose.msra.mxu0 0.0
          %661 = vmatprep.subr.mxu0 0.0
          %662 = vmatpush2.xpose.msra.mxu0 0.0
          %663 = vmatprep.subr.mxu0 0.0
          %664 = vmatpush2.xpose.msra.mxu0 0.0
          %665 = vmatprep.subr.mxu0 0.0
          %666 = vmatpush2.xpose.msra.mxu0 0.0
          %667 = vmatprep.subr.mxu0 0.0
          %668 = vmatpush2.xpose.msra.mxu0 0.0
          %669 = vmatprep.subr.mxu0 0.0
          %670 = vmatpush2.xpose.msra.mxu0 0.0
          %671 = vmatprep.subr.mxu0 0.0
          %672 = vmatpush2.xpose.msra.mxu0 0.0
          %673 = vmatprep.subr.mxu0 0.0
          %674 = vmatpush2.xpose.msra.mxu0 0.0
          %675 = vmatprep.subr.mxu0 0.0
          %676 = vmatpush2.xpose.msra.mxu0 0.0
          %677 = vmatprep.subr.mxu0 0.0
          %678 = vmatpush2.xpose.msra.mxu0 0.0
          %679 = vmatprep.subr.mxu0 0.0
          %680 = vmatpush2.xpose.msra.mxu0 0.0
          %681 = vmatprep.subr.mxu0 0.0
          %682 = vmatpush2.xpose.msra.mxu0 0.0
          %683 = vmatprep.subr.mxu0 0.0
          %684 = vmatpush2.xpose.msra.mxu0 0.0
          %685 = vmatprep.subr.mxu0 0.0
          %686 = vmatpush2.xpose.msra.mxu0 0.0
          %687 = vmatprep.subr.mxu0 0.0
          %688 = vmatpush2.xpose.msra.mxu0 0.0
          %689 = vmatprep.mubr.f32.mxu0 0.0
          %690 = vmatmul.mubr.f32.gmra.mxu0 %v624
          %v691 = vpop.f32.mrf.mxu0
          %v692 = vadd.f32 0.0, %v691
          %v693 = vpop.f32.mrf.mxu0
          %694 = vdwg.mxu0
          %v695 = vld [vmem:[%s3] sm:$0xff]
          %v696 = vld [vmem:[%s3 + $0x8] sm:$0xff]
          %v698 = vsel %vm534, %v692, 0
          %v701 = vsel %vm534, %v695, 0
          %v704 = vsel %vm534, %v696, 0
          %706 = vmatprep.subr.mxu0 0.0
          %707 = vmatpush1.xpose.msra.mxu0 0.0
          %708 = vmatprep.subr.mxu0 0.0
          %709 = vmatpush1.xpose.msra.mxu0 0.0
          %710 = vmatprep.subr.mxu0 0.0
          %711 = vmatpush1.xpose.msra.mxu0 0.0
          %712 = vmatprep.subr.mxu0 0.0
          %713 = vmatpush1.xpose.msra.mxu0 0.0
          %714 = vmatprep.subr.mxu0 0.0
          %715 = vmatpush1.xpose.msra.mxu0 0.0
          %716 = vmatprep.subr.mxu0 0.0
          %717 = vmatpush1.xpose.msra.mxu0 0.0
          %718 = vmatprep.subr.mxu0 0.0
          %719 = vmatpush1.xpose.msra.mxu0 0.0
          %720 = vmatprep.subr.mxu0 0.0
          %721 = vmatpush1.xpose.msra.mxu0 0.0
          %722 = vmatprep.subr.mxu0 0.0
          %723 = vmatpush1.xpose.msra.mxu0 0.0
          %724 = vmatprep.subr.mxu0 0.0
          %725 = vmatpush1.xpose.msra.mxu0 0.0
          %726 = vmatprep.subr.mxu0 0.0
          %727 = vmatpush1.xpose.msra.mxu0 0.0
          %728 = vmatprep.subr.mxu0 0.0
          %729 = vmatpush1.xpose.msra.mxu0 0.0
          %730 = vmatprep.subr.mxu0 0.0
          %731 = vmatpush1.xpose.msra.mxu0 0.0
          %732 = vmatprep.subr.mxu0 0.0
          %733 = vmatpush1.xpose.msra.mxu0 0.0
          %734 = vmatprep.subr.mxu0 0.0
          %735 = vmatpush1.xpose.msra.mxu0 %v704
          %736 = vmatprep.subr.mxu0 0.0
          %737 = vmatpush1.xpose.msra.mxu0 %v701
          %738 = vmatprep.subr.mxu0 0.0
          %739 = vmatpush2.xpose.msra.mxu0 0.0
          %740 = vmatprep.subr.mxu0 0.0
          %741 = vmatpush2.xpose.msra.mxu0 0.0
          %742 = vmatprep.subr.mxu0 0.0
          %743 = vmatpush2.xpose.msra.mxu0 0.0
          %744 = vmatprep.subr.mxu0 0.0
          %745 = vmatpush2.xpose.msra.mxu0 0.0
          %746 = vmatprep.subr.mxu0 0.0
          %747 = vmatpush2.xpose.msra.mxu0 0.0
          %748 = vmatprep.subr.mxu0 0.0
          %749 = vmatpush2.xpose.msra.mxu0 0.0
          %750 = vmatprep.subr.mxu0 0.0
          %751 = vmatpush2.xpose.msra.mxu0 0.0
          %752 = vmatprep.subr.mxu0 0.0
          %753 = vmatpush2.xpose.msra.mxu0 0.0
          %754 = vmatprep.subr.mxu0 0.0
          %755 = vmatpush2.xpose.msra.mxu0 0.0
          %756 = vmatprep.subr.mxu0 0.0
          %757 = vmatpush2.xpose.msra.mxu0 0.0
          %758 = vmatprep.subr.mxu0 0.0
          %759 = vmatpush2.xpose.msra.mxu0 0.0
          %760 = vmatprep.subr.mxu0 0.0
          %761 = vmatpush2.xpose.msra.mxu0 0.0
          %762 = vmatprep.subr.mxu0 0.0
          %763 = vmatpush2.xpose.msra.mxu0 0.0
          %764 = vmatprep.subr.mxu0 0.0
          %765 = vmatpush2.xpose.msra.mxu0 0.0
          %766 = vmatprep.subr.mxu0 0.0
          %767 = vmatpush2.xpose.msra.mxu0 0.0
          %768 = vmatprep.subr.mxu0 0.0
          %769 = vmatpush2.xpose.msra.mxu0 0.0
          %770 = vmatprep.mubr.f32.mxu0 0.0
          %771 = vmatmul.mubr.f32.gmra.mxu0 %v698
          %v772 = vpop.f32.mrf.mxu0
          %v773 = vadd.f32 0.0, %v772
          %v774 = vpop.f32.mrf.mxu0
          %775 = vdwg.mxu0
          %v776 = vxor.u32 %v773, 2147483648
          %v777 = vmul.f32 %v776, 1.442695
          %v778 = vpow.pop %v777
          %v779 = vadd.f32 %v778, 1.0
          %v780 = vrcp.pop %v779
          %v781 = vmul.f32 1.0, %v780
          %782 = vst.msk [vmem:[%s230] sm:$0x1] %vm448, %v781
        $region48: #{tpu_custom_call.1} parent=35 // pred_fallthru
          _
        %s783 = sand.u32 %s132, 1
        %s784 = scalar_lea.sflag [#allocation5], %s783
        %s785 = sand.u32 %s132, 1
        %s786 = scalar_lea.vmem [#allocation6], %s785
        // Predicated region
        $region49: #{tpu_custom_call.1} parent=35 // pred_check
          %p787 = pneg %p142
        $region50: #{tpu_custom_call.1} parent=35 // pred_check_branch
          %789 = sbr.rel (%p787) target = $region52
        $region51: #{tpu_custom_call.1} parent=35 // pred_region
          %s791 = ssub.s32 16, 16
          %792 = vsyncadd %s784, %s791
          %s793 = smul.addr %s25, 16
          %s794 = scalar_lea.hbm %s4, %s793
          %s796 = sshll.u32 %s786, 4
          %s797 = int_to_ptr.vmem [resolvable:$true] %s796
          %799 = dma.vmem_to_hbm [thread:$0]  %s797, 16, %s794, %s784
        $region52: #{tpu_custom_call.1} parent=35 // pred_fallthru
          _
      $region36: #{tpu_custom_call.1} parent=5 // pred_fallthru
        _
      %p800 = scmp.le.s32.totalorder 2, %s16
      // Predicated region
      $region53: #{tpu_custom_call.1} parent=5 // pred_check
        %p801 = pneg %p800
      $region54: #{tpu_custom_call.1} parent=5 // pred_check_branch
        %803 = sbr.rel (%p801) target = $region56
      $region55: #{tpu_custom_call.1} parent=5 // pred_region
        %s804 = ssub.s32 %s16, 2
        // Predicated region
        $region57: #{tpu_custom_call.1} parent=55 // pred_check
          %p805 = pneg %p148
        $region58: #{tpu_custom_call.1} parent=55 // pred_check_branch
          %807 = sbr.rel (%p805) target = $region60
        $region59: #{tpu_custom_call.1} parent=55 // pred_region
          %s808 = sand.u32 %s133, 1
          %s809 = scalar_lea.sflag [#allocation5], %s808
          %s810 = sand.u32 %s133, 1
          %s811 = scalar_lea.vmem [#allocation6], %s810
          %812 = dma.done %s809, 16
        $region60: #{tpu_custom_call.1} parent=55 // pred_fallthru
          _
      $region56: #{tpu_custom_call.1} parent=5 // pred_fallthru
        _
    $region6: #{tpu_custom_call.1} parent=1 // loop_footer
      %s20 = sadd.s32 1, %s16
    $region7: #{tpu_custom_call.1} parent=1 // loop_footer_branch
      %15 = sbr.rel target = $region3
    $region8: #{tpu_custom_call.1} parent=1 // loop_exit
      _
    %813 = vsyncpa [#allocation4], 1
    %s814 = scalar_lea.sflag [#allocation4], 1
    %815 = vsyncpa %s814, 1
    %816 = vsyncpa [#allocation5], 1
    %s817 = scalar_lea.sflag [#allocation5], 1
    %818 = vsyncpa %s817, 1

</llo_original>
